<compile_context>
chip_gen: v6e
topology: v6e:2x2x1
jax: 0.10.0
libtpu: 0.0.40
codegen_flags: <defaults>
</compile_context>

<pallas_src>
import jax
import jax.numpy as jnp
from jax.experimental import pallas as pl
from jax.experimental.pallas import tpu as pltpu


def _make_kernel(k: int):
    inv_k = float(1.0 / k)

    def kernel(*refs):
        o_ref = refs[-1]
        taps = refs[:-1]
        acc = taps[0][...].astype(jnp.float32)
        for r in taps[1:]:
            acc = acc + r[...].astype(jnp.float32)
        o_ref[...] = (acc * inv_k).astype(o_ref.dtype)

    return kernel


def _pick_tile(dim: int, unit: int, target: int) -> int:
    """Largest multiple of `unit` that divides `dim` and is <= target, else full dim."""
    if dim <= target:
        return dim
    t = (target // unit) * unit
    while t >= unit:
        if dim % t == 0:
            return t
        t -= unit
    return dim


def time_downsample_2x(x, kernel_size: int = 3):
    """x: (B, C, T, H, W) -> (B, C, (T-1)//2 + 1, H, W); matches TimeDownsample2x."""
    B, C, T, H, W = x.shape
    k = kernel_size
    BC = B * C
    HW = H * W
    T_out = (T + (k - 1) - k) // 2 + 1  # == (T - 1) // 2 + 1

    # Contiguous (free) 2-D view: row = (b, c), col = t * HW + (h * W + w).
    x2d = x.reshape(BC, T * HW)

    # Tile sizes (lane-dense; conservative VMEM budget for all TPU generations).
    tile_bc = _pick_tile(BC, 8, 128)
    tile_hw = _pick_tile(HW, 128, 2048)
    num_bc = BC // tile_bc
    num_hw = HW // tile_hw

    def make_in_spec(tap: int):
        def idx(bc, t, h):
            # Time index in the *unpadded* input, replicate-padded by clamping.
            ti = jnp.maximum(2 * t + tap - (k - 1), 0)
            return (bc, ti * num_hw + h)

        return pl.BlockSpec((tile_bc, tile_hw), idx)

    out2d = pl.pallas_call(
        _make_kernel(k),
        out_shape=jax.ShapeDtypeStruct((BC, T_out * HW), x.dtype),
        grid_spec=pltpu.PrefetchScalarGridSpec(
            num_scalar_prefetch=0,
            grid=(num_bc, T_out, num_hw),
            in_specs=[make_in_spec(tap) for tap in range(k)],
            out_specs=pl.BlockSpec(
                (tile_bc, tile_hw), lambda bc, t, h: (bc, t * num_hw + h)
            ),
        ),
        compiler_params=pltpu.CompilerParams(
            dimension_semantics=("parallel", "parallel", "parallel")
        ),
    )(*([x2d] * k))

    # Contiguous (free) reshape back to NCDHW.
    return out2d.reshape(B, C, T_out, H, W)


def _reference(x, kernel_size: int = 3):
    """Pure-JAX reference of the PyTorch forward, for verification."""
    k = kernel_size
    first_frame_pad = jnp.repeat(x[:, :, :1, :, :], k - 1, axis=2)
    xp = jnp.concatenate([first_frame_pad, x], axis=2)
    T_pad = xp.shape[2]
    T_out = (T_pad - k) // 2 + 1
    windows = jnp.stack([xp[:, :, 2 * t: 2 * t + k] for t in range(T_out)], axis=2)
    return windows.mean(axis=3)


if __name__ == "__main__":
    key = jax.random.PRNGKey(0)
    B, C, T, H, W = 2, 4, 8, 16, 16
    x = jax.random.normal(key, (B, C, T, H, W), dtype=jnp.float32)

    out = time_downsample_2x(x, kernel_size=3)
    out = jax.block_until_ready(out)

    ref = _reference(x, kernel_size=3)
    assert out.shape == ref.shape, (out.shape, ref.shape)
    assert jnp.allclose(out, ref, atol=1e-5, rtol=1e-5)

    print("KERNEL_OK")
</pallas_src>

<mosaic_0001>
module attributes {stable_mosaic.version = 11 : i64} {
  func.func @kernel(%arg0: i32, %arg1: i32, %arg2: i32, %arg3: memref<8x256xf32, #tpu.memory_space<vmem>>, %arg4: memref<8x256xf32, #tpu.memory_space<vmem>>, %arg5: memref<8x256xf32, #tpu.memory_space<vmem>>, %arg6: memref<8x256xf32, #tpu.memory_space<vmem>>) attributes {dimension_semantics = [#tpu.dimension_semantics<parallel>, #tpu.dimension_semantics<parallel>, #tpu.dimension_semantics<parallel>], iteration_bounds = array<i64: 1, 4, 1>, scalar_prefetch = 0 : i64, scratch_operands = 0 : i64, tpu.core_type = #tpu.core_type<tc>, window_params = [{transform_indices = @transform_0, window_bounds = array<i64: 8, 256>}, {transform_indices = @transform_1, window_bounds = array<i64: 8, 256>}, {transform_indices = @transform_2, window_bounds = array<i64: 8, 256>}, {transform_indices = @transform_3, window_bounds = array<i64: 8, 256>}]} {
    %c0 = arith.constant 0 : index
    %c0_0 = arith.constant 0 : index
    %0 = vector.load %arg3[%c0, %c0_0] : memref<8x256xf32, #tpu.memory_space<vmem>>, vector<8x256xf32>
    %c0_1 = arith.constant 0 : index
    %c0_2 = arith.constant 0 : index
    %1 = vector.load %arg4[%c0_1, %c0_2] : memref<8x256xf32, #tpu.memory_space<vmem>>, vector<8x256xf32>
    %2 = arith.addf %0, %1 : vector<8x256xf32>
    %c0_3 = arith.constant 0 : index
    %c0_4 = arith.constant 0 : index
    %3 = vector.load %arg5[%c0_3, %c0_4] : memref<8x256xf32, #tpu.memory_space<vmem>>, vector<8x256xf32>
    %4 = arith.addf %2, %3 : vector<8x256xf32>
    %cst = arith.constant 0.333333343 : f32
    %5 = vector.broadcast %cst : f32 to vector<8x256xf32>
    %6 = arith.mulf %4, %5 : vector<8x256xf32>
    %c0_5 = arith.constant 0 : index
    %c0_6 = arith.constant 0 : index
    %7 = vector.load %arg6[%c0_5, %c0_6] : memref<8x256xf32, #tpu.memory_space<vmem>>, vector<8x256xf32>
    tpu.vector_store %arg6[%c0_5, %c0_6], %6 {strides = array<i32>} : memref<8x256xf32, #tpu.memory_space<vmem>>, vector<8x256xf32>,
    return
  }
  func.func @transform_0(%arg0: i32, %arg1: i32, %arg2: i32) -> (i32, i32) {
    %c2_i32 = arith.constant 2 : i32
    %0 = arith.muli %c2_i32, %arg1 : i32
    %c0_i32 = arith.constant 0 : i32
    %1 = arith.addi %0, %c0_i32 : i32
    %c2_i32_0 = arith.constant 2 : i32
    %2 = arith.subi %1, %c2_i32_0 : i32
    %c0_i32_1 = arith.constant 0 : i32
    %3 = arith.maxsi %2, %c0_i32_1 : i32
    %c1_i32 = arith.constant 1 : i32
    %4 = arith.muli %3, %c1_i32 : i32
    %5 = arith.addi %4, %arg2 : i32
    %c0_i32_2 = arith.constant 0 : i32
    return %arg0, %5 : i32, i32
  }
  func.func @transform_1(%arg0: i32, %arg1: i32, %arg2: i32) -> (i32, i32) {
    %c2_i32 = arith.constant 2 : i32
    %0 = arith.muli %c2_i32, %arg1 : i32
    %c1_i32 = arith.constant 1 : i32
    %1 = arith.addi %0, %c1_i32 : i32
    %c2_i32_0 = arith.constant 2 : i32
    %2 = arith.subi %1, %c2_i32_0 : i32
    %c0_i32 = arith.constant 0 : i32
    %3 = arith.maxsi %2, %c0_i32 : i32
    %c1_i32_1 = arith.constant 1 : i32
    %4 = arith.muli %3, %c1_i32_1 : i32
    %5 = arith.addi %4, %arg2 : i32
    %c0_i32_2 = arith.constant 0 : i32
    return %arg0, %5 : i32, i32
  }
  func.func @transform_2(%arg0: i32, %arg1: i32, %arg2: i32) -> (i32, i32) {
    %c2_i32 = arith.constant 2 : i32
    %0 = arith.muli %c2_i32, %arg1 : i32
    %c2_i32_0 = arith.constant 2 : i32
    %1 = arith.addi %0, %c2_i32_0 : i32
    %c2_i32_1 = arith.constant 2 : i32
    %2 = arith.subi %1, %c2_i32_1 : i32
    %c0_i32 = arith.constant 0 : i32
    %3 = arith.maxsi %2, %c0_i32 : i32
    %c1_i32 = arith.constant 1 : i32
    %4 = arith.muli %3, %c1_i32 : i32
    %5 = arith.addi %4, %arg2 : i32
    %c0_i32_2 = arith.constant 0 : i32
    return %arg0, %5 : i32, i32
  }
  func.func @transform_3(%arg0: i32, %arg1: i32, %arg2: i32) -> (i32, i32) {
    %c1_i32 = arith.constant 1 : i32
    %0 = arith.muli %arg1, %c1_i32 : i32
    %1 = arith.addi %0, %arg2 : i32
    %c0_i32 = arith.constant 0 : i32
    return %arg0, %1 : i32, i32
  }
}

</mosaic_0001>

<llo_original>
// kernel: tpu_custom_call.1
$region0: #{tpu_custom_call.1}
  #allocation0 [shape = 'u32[]', space=smem, size = 0x4, offset = 0x4, fixed_abs, tag = 'smem constant byte address 0x4 - core index']
  #allocation1 [shape = 'u32[144,128]{1,0:T(1,128)}', space=vmem, size = 0x12000, scoped, tag = 'internal scratch']
  %s0 = inlined_call_operand.hbm [shape: f32[8,2048], index: 0, kind: input, shape index: {}]
  %s1 = inlined_call_operand.hbm [shape: f32[8,2048], index: 1, kind: input, shape index: {}]
  %s2 = inlined_call_operand.hbm [shape: f32[8,2048], index: 2, kind: input, shape index: {}]
  %s3 = inlined_call_operand.hbm [shape: f32[8,1024], index: 3, kind: output, shape index: {}]
  %s4 = sld [smem:[#allocation0]]
  $region57: #{tpu_custom_call.1} parent=0
    _
  %s6 = ssub.s32 1, %s4
  %s7 = scalar_select 0, %s6, %s4
  $region1: #{tpu_custom_call.1} parent=0
    #allocation2 [shape = 'u8[16384]{0}', space=vmem, size = 0x4000, scoped, tag = 'input window, operand 0']
    #allocation3 [shape = 's32[2]{0}', space=sflag, size = 0x8, scoped, tag = 'scoped memory for tpu_custom_call.1']
    #allocation4 [shape = 's32[2]{0}', space=sflag, size = 0x8, scoped, tag = 'scoped memory for tpu_custom_call.1']
    #allocation5 [shape = 'u8[16384]{0}', space=vmem, size = 0x4000, scoped, tag = 'input window, operand 1']
    #allocation6 [shape = 's32[2]{0}', space=sflag, size = 0x8, scoped, tag = 'scoped memory for tpu_custom_call.1']
    #allocation7 [shape = 'u8[16384]{0}', space=vmem, size = 0x4000, scoped, tag = 'input window, operand 2']
    #allocation8 [shape = 'u8[16384]{0}', space=vmem, size = 0x4000, scoped, tag = 'output window, operand 0']
    %8 = vsyncpa [#allocation3], 0
    %s9 = scalar_lea.sflag [#allocation3], 1
    %10 = vsyncpa %s9, 0
    %11 = vsyncpa [#allocation6], 0
    %s12 = scalar_lea.sflag [#allocation6], 1
    %13 = vsyncpa %s12, 0
    %14 = vsyncpa [#allocation4], 0
    %s15 = scalar_lea.sflag [#allocation4], 1
    %16 = vsyncpa %s15, 0
    loop: start=0, step=1, limit=6
    $region2: #{tpu_custom_call.1} parent=1 // loop_pre_header
      _
    $region3: #{tpu_custom_call.1} parent=1 // loop_header
      %s18 = sphi 0, %s22
      %p19 = scmp.ge.s32.totalorder %s18, 6
      %s25 = sphi 0, %s44
      %s26 = sphi 0, %s40
      %s27 = sphi 0, %s36
      %s28 = sphi 0, %s25
      %s29 = sphi 0, %s26
      %s30 = sphi 0, %s27
      %s31 = sphi 0, %s28
      %s32 = sphi 0, %s29
      %s33 = sphi 0, %s30
      %s59 = sphi 0, %s61
      %s62 = sphi 0, %s59
      %s63 = sphi 0, %s62
      %s79 = sphi 0, %s63
      %s97 = sphi 0, %s99
      %s100 = sphi 0, %s97
      %s101 = sphi 0, %s100
      %s117 = sphi 0, %s101
      %s133 = sphi 0, %s135
      %s136 = sphi 0, %s133
      %s137 = sphi 0, %s136
      %s153 = sphi 0, %s137
      %s163 = sphi 0, %s165
      %s166 = sphi 0, %s163
      %s167 = sphi 0, %s166
      %s183 = sphi 0, %s167
    $region4: #{tpu_custom_call.1} parent=1 // loop_header_branch
      %21 = sbr.rel (%p19) target = $region8
    $region5: #{tpu_custom_call.1} parent=1 // loop_body
      %s23 = ssub.s32 %s18, 1
      %s24 = ssub.s32 %s18, 2
      %s34 = sadd.s32 1, %s27
      %p35 = scmp.ge.s32.totalorder %s34, 1
      %s36 = scalar_select %p35, 0, %s34
      %s37 = sadd.s32 1, %s26
      %s38 = scalar_select %p35, %s37, %s26
      %p39 = scmp.ge.s32.totalorder %s38, 4
      %s40 = scalar_select %p39, 0, %s38
      %s41 = sadd.s32 1, %s25
      %s42 = scalar_select %p39, %s41, %s25
      %p43 = scmp.ge.s32.totalorder %s42, 1
      %s44 = scalar_select %p43, 0, %s42
      %s45 = smul.u32 %s26, 2
      %s46 = sadd.s32 %s45, 4294967294
      %p47 = scmp.gt.s32.totalorder %s46, 0
      %s48 = scalar_select %p47, %s46, 0
      %s49 = sadd.s32 %s48, %s27
      %s50 = smul.u32 %s40, 2
      %s51 = sadd.s32 %s50, 4294967294
      %p52 = scmp.gt.s32.totalorder %s51, 0
      %s53 = scalar_select %p52, %s51, 0
      %s54 = sadd.s32 %s53, %s36
      %s55 = ssub.s32 %s25, %s44
      %s56 = ssub.s32 %s49, %s54
      %s57 = sor.u32 %s55, %s56
      %p58 = scmp.eq.s32.totalorder %s57, 0
      %s60 = sadd.s32 %s59, 1
      %s61 = scalar_select %p58, %s59, %s60
      %p64 = pneg %p58
      %p65 = scmp.eq.s32.totalorder %s18, 3
      %p66 = por %p64, %p65
      %p67 = scmp.ne.s32.totalorder %s59, %s62
      %p68 = scmp.eq.s32.totalorder %s18, 0
      %p69 = por %p67, %p68
      %p70 = scmp.ne.s32.totalorder %s59, %s62
      %p71 = scmp.eq.s32.totalorder %s23, 3
      %p72 = por %p70, %p71
      %p73 = scmp.ne.s32.totalorder %s62, %s63
      %p74 = scmp.eq.s32.totalorder %s23, 0
      %p75 = por %p73, %p74
      %p76 = scmp.ne.s32.totalorder %s62, %s63
      %p77 = scmp.eq.s32.totalorder %s24, 3
      %p78 = por %p76, %p77
      %p80 = scmp.ne.s32.totalorder %s63, %s79
      %p81 = scmp.eq.s32.totalorder %s24, 0
      %p82 = por %p80, %p81
      %s83 = smul.u32 %s26, 2
      %s84 = sadd.s32 %s83, 4294967295
      %p85 = scmp.gt.s32.totalorder %s84, 0
      %s86 = scalar_select %p85, %s84, 0
      %s87 = sadd.s32 %s86, %s27
      %s88 = smul.u32 %s40, 2
      %s89 = sadd.s32 %s88, 4294967295
      %p90 = scmp.gt.s32.totalorder %s89, 0
      %s91 = scalar_select %p90, %s89, 0
      %s92 = sadd.s32 %s91, %s36
      %s93 = ssub.s32 %s25, %s44
      %s94 = ssub.s32 %s87, %s92
      %s95 = sor.u32 %s93, %s94
      %p96 = scmp.eq.s32.totalorder %s95, 0
      %s98 = sadd.s32 %s97, 1
      %s99 = scalar_select %p96, %s97, %s98
      %p102 = pneg %p96
      %p103 = scmp.eq.s32.totalorder %s18, 3
      %p104 = por %p102, %p103
      %p105 = scmp.ne.s32.totalorder %s97, %s100
      %p106 = scmp.eq.s32.totalorder %s18, 0
      %p107 = por %p105, %p106
      %p108 = scmp.ne.s32.totalorder %s97, %s100
      %p109 = scmp.eq.s32.totalorder %s23, 3
      %p110 = por %p108, %p109
      %p111 = scmp.ne.s32.totalorder %s100, %s101
      %p112 = scmp.eq.s32.totalorder %s23, 0
      %p113 = por %p111, %p112
      %p114 = scmp.ne.s32.totalorder %s100, %s101
      %p115 = scmp.eq.s32.totalorder %s24, 3
      %p116 = por %p114, %p115
      %p118 = scmp.ne.s32.totalorder %s101, %s117
      %p119 = scmp.eq.s32.totalorder %s24, 0
      %p120 = por %p118, %p119
      %s121 = smul.u32 %s26, 2
      %p122 = scmp.gt.s32.totalorder %s121, 0
      %s123 = scalar_select %p122, %s121, 0
      %s124 = sadd.s32 %s123, %s27
      %s125 = smul.u32 %s40, 2
      %p126 = scmp.gt.s32.totalorder %s125, 0
      %s127 = scalar_select %p126, %s125, 0
      %s128 = sadd.s32 %s127, %s36
      %s129 = ssub.s32 %s25, %s44
      %s130 = ssub.s32 %s124, %s128
      %s131 = sor.u32 %s129, %s130
      %p132 = scmp.eq.s32.totalorder %s131, 0
      %s134 = sadd.s32 %s133, 1
      %s135 = scalar_select %p132, %s133, %s134
      %p138 = pneg %p132
      %p139 = scmp.eq.s32.totalorder %s18, 3
      %p140 = por %p138, %p139
      %p141 = scmp.ne.s32.totalorder %s133, %s136
      %p142 = scmp.eq.s32.totalorder %s18, 0
      %p143 = por %p141, %p142
      %p144 = scmp.ne.s32.totalorder %s133, %s136
      %p145 = scmp.eq.s32.totalorder %s23, 3
      %p146 = por %p144, %p145
      %p147 = scmp.ne.s32.totalorder %s136, %s137
      %p148 = scmp.eq.s32.totalorder %s23, 0
      %p149 = por %p147, %p148
      %p150 = scmp.ne.s32.totalorder %s136, %s137
      %p151 = scmp.eq.s32.totalorder %s24, 3
      %p152 = por %p150, %p151
      %p154 = scmp.ne.s32.totalorder %s137, %s153
      %p155 = scmp.eq.s32.totalorder %s24, 0
      %p156 = por %p154, %p155
      %s157 = sadd.s32 %s26, %s27
      %s158 = sadd.s32 %s40, %s36
      %s159 = ssub.s32 %s25, %s44
      %s160 = ssub.s32 %s157, %s158
      %s161 = sor.u32 %s159, %s160
      %p162 = scmp.eq.s32.totalorder %s161, 0
      %s164 = sadd.s32 %s163, 1
      %s165 = scalar_select %p162, %s163, %s164
      %p168 = pneg %p162
      %p169 = scmp.eq.s32.totalorder %s18, 3
      %p170 = por %p168, %p169
      %p171 = scmp.ne.s32.totalorder %s163, %s166
      %p172 = scmp.eq.s32.totalorder %s18, 0
      %p173 = por %p171, %p172
      %p174 = scmp.ne.s32.totalorder %s163, %s166
      %p175 = scmp.eq.s32.totalorder %s23, 3
      %p176 = por %p174, %p175
      %p177 = scmp.ne.s32.totalorder %s166, %s167
      %p178 = scmp.eq.s32.totalorder %s23, 0
      %p179 = por %p177, %p178
      %p180 = scmp.ne.s32.totalorder %s166, %s167
      %p181 = scmp.eq.s32.totalorder %s24, 3
      %p182 = por %p180, %p181
      %p184 = scmp.ne.s32.totalorder %s167, %s183
      %p185 = scmp.eq.s32.totalorder %s24, 0
      %p186 = por %p184, %p185
      %p187 = scmp.le.s32.totalorder 1, %s18
      %p188 = scmp.lt.s32.totalorder %s18, 5
      %p189 = pnand %p187, %p188
      %p190 = pneg %p189
      // Predicated region
      $region9: #{tpu_custom_call.1} parent=5 // pred_check
        _
      $region10: #{tpu_custom_call.1} parent=5 // pred_check_branch
        %192 = sbr.rel (%p189) target = $region12
      $region11: #{tpu_custom_call.1} parent=5 // pred_region
        %s193 = ssub.s32 %s18, 1
      $region12: #{tpu_custom_call.1} parent=5 // pred_fallthru
        _
      %p194 = scmp.lt.s32.totalorder %s18, 4
      // Predicated region
      $region13: #{tpu_custom_call.1} parent=5 // pred_check
        %p195 = pneg %p194
      $region14: #{tpu_custom_call.1} parent=5 // pred_check_branch
        %197 = sbr.rel (%p195) target = $region16
      $region15: #{tpu_custom_call.1} parent=5 // pred_region
        // Predicated region
        $region17: #{tpu_custom_call.1} parent=15 // pred_check
          %p198 = pneg %p69
        $region18: #{tpu_custom_call.1} parent=15 // pred_check_branch
          %200 = sbr.rel (%p198) target = $region20
        $region19: #{tpu_custom_call.1} parent=15 // pred_region
          %s201 = sand.u32 %s59, 1
          %s202 = scalar_lea.sflag [#allocation3], %s201
          %s203 = sand.u32 %s59, 1
          %s204 = smul.addr %s203, 16
          %s205 = scalar_lea.vmem [#allocation2], %s204
          %s206 = smul.u32 %s26, 2
          %s207 = sadd.s32 %s206, 4294967294
          %p208 = scmp.gt.s32.totalorder %s207, 0
          %s209 = scalar_select %p208, %s207, 0
          %s210 = sadd.s32 %s209, %s27
          %s211 = smul.u32 2, %s210
          %s213 = ssub.s32 256, 256
          %214 = vsyncadd %s202, %s213
          %s215 = smul.addr %s25, 16
          %s216 = sadd.s32 %s211, %s215
          %s217 = smul.addr %s216, 128
          %s218 = scalar_lea.hbm %s0, %s217
          %s220 = sshll.u32 %s205, 4
          %s221 = int_to_ptr.vmem [resolvable:$true] %s220
          %223 = dma.hbm_to_vmem [thread:$0]  %s218, 256, %s221, %s202
        $region20: #{tpu_custom_call.1} parent=15 // pred_fallthru
          _
        // Predicated region
        $region21: #{tpu_custom_call.1} parent=15 // pred_check
          %p224 = pneg %p107
        $region22: #{tpu_custom_call.1} parent=15 // pred_check_branch
          %226 = sbr.rel (%p224) target = $region24
        $region23: #{tpu_custom_call.1} parent=15 // pred_region
          %s227 = sand.u32 %s18, 1
          %s228 = scalar_lea.sflag [#allocation6], %s227
          %s229 = sand.u32 %s97, 1
          %s230 = smul.addr %s229, 16
          %s231 = scalar_lea.vmem [#allocation5], %s230
          %s232 = smul.u32 %s26, 2
          %s233 = sadd.s32 %s232, 4294967295
          %p234 = scmp.gt.s32.totalorder %s233, 0
          %s235 = scalar_select %p234, %s233, 0
          %s236 = sadd.s32 %s235, %s27
          %s237 = smul.u32 2, %s236
          %s239 = ssub.s32 256, 256
          %240 = vsyncadd %s228, %s239
          %s241 = smul.addr %s25, 16
          %s242 = sadd.s32 %s237, %s241
          %s243 = smul.addr %s242, 128
          %s244 = scalar_lea.hbm %s1, %s243
          %s246 = sshll.u32 %s231, 4
          %s247 = int_to_ptr.vmem [resolvable:$true] %s246
          %249 = dma.hbm_to_vmem [thread:$0]  %s244, 256, %s247, %s228
        $region24: #{tpu_custom_call.1} parent=15 // pred_fallthru
          _
        // Predicated region
        $region25: #{tpu_custom_call.1} parent=15 // pred_check
          %p250 = pneg %p143
        $region26: #{tpu_custom_call.1} parent=15 // pred_check_branch
          %252 = sbr.rel (%p250) target = $region28
        $region27: #{tpu_custom_call.1} parent=15 // pred_region
          %s253 = sand.u32 %s18, 1
          %s254 = scalar_lea.sflag [#allocation6], %s253
          %s255 = sand.u32 %s133, 1
          %s256 = smul.addr %s255, 16
          %s257 = scalar_lea.vmem [#allocation7], %s256
          %s258 = smul.u32 %s26, 2
          %p259 = scmp.gt.s32.totalorder %s258, 0
          %s260 = scalar_select %p259, %s258, 0
          %s261 = sadd.s32 %s260, %s27
          %s262 = smul.u32 2, %s261
          %s264 = ssub.s32 256, 256
          %265 = vsyncadd %s254, %s264
          %s266 = smul.addr %s25, 16
          %s267 = sadd.s32 %s262, %s266
          %s268 = smul.addr %s267, 128
          %s269 = scalar_lea.hbm %s2, %s268
          %s271 = sshll.u32 %s257, 4
          %s272 = int_to_ptr.vmem [resolvable:$true] %s271
          %274 = dma.hbm_to_vmem [thread:$0]  %s269, 256, %s272, %s254
        $region28: #{tpu_custom_call.1} parent=15 // pred_fallthru
          _
      $region16: #{tpu_custom_call.1} parent=5 // pred_fallthru
        _
      %p275 = scmp.le.s32.totalorder 1, %s18
      %p276 = scmp.lt.s32.totalorder %s18, 5
      %p277 = pnand %p275, %p276
      %p278 = pneg %p277
      // Predicated region
      $region29: #{tpu_custom_call.1} parent=5 // pred_check
        _
      $region30: #{tpu_custom_call.1} parent=5 // pred_check_branch
        %280 = sbr.rel (%p277) target = $region32
      $region31: #{tpu_custom_call.1} parent=5 // pred_region
        %s281 = ssub.s32 %s18, 1
        %s282 = sand.u32 %s62, 1
        %s283 = scalar_lea.sflag [#allocation3], %s282
        %s284 = sand.u32 %s62, 1
        %s285 = smul.addr %s284, 16
        %s286 = scalar_lea.vmem [#allocation2], %s285
        // Predicated region
        $region33: #{tpu_custom_call.1} parent=31 // pred_check
          %p287 = pneg %p75
        $region34: #{tpu_custom_call.1} parent=31 // pred_check_branch
          %289 = sbr.rel (%p287) target = $region36
        $region35: #{tpu_custom_call.1} parent=31 // pred_region
          %290 = dma.done %s283, 256
        $region36: #{tpu_custom_call.1} parent=31 // pred_fallthru
          _
        %s291 = sand.u32 %s23, 1
        %s292 = scalar_lea.sflag [#allocation6], %s291
        %s293 = sand.u32 %s100, 1
        %s294 = smul.addr %s293, 16
        %s295 = scalar_lea.vmem [#allocation5], %s294
        // Predicated region
        $region37: #{tpu_custom_call.1} parent=31 // pred_check
          %p296 = pneg %p113
        $region38: #{tpu_custom_call.1} parent=31 // pred_check_branch
          %298 = sbr.rel (%p296) target = $region40
        $region39: #{tpu_custom_call.1} parent=31 // pred_region
          %299 = dma.done %s292, 256
        $region40: #{tpu_custom_call.1} parent=31 // pred_fallthru
          _
        %s300 = sand.u32 %s23, 1
        %s301 = scalar_lea.sflag [#allocation6], %s300
        %s302 = sand.u32 %s136, 1
        %s303 = smul.addr %s302, 16
        %s304 = scalar_lea.vmem [#allocation7], %s303
        // Predicated region
        $region41: #{tpu_custom_call.1} parent=31 // pred_check
          %p305 = pneg %p149
        $region42: #{tpu_custom_call.1} parent=31 // pred_check_branch
          %307 = sbr.rel (%p305) target = $region44
        $region43: #{tpu_custom_call.1} parent=31 // pred_region
          %308 = dma.done %s301, 256
        $region44: #{tpu_custom_call.1} parent=31 // pred_fallthru
          _
        %s309 = sand.u32 %s62, 1
        %s310 = scalar_lea.sflag [#allocation3], %s309
        %s311 = sand.u32 %s62, 1
        %s312 = smul.addr %s311, 16
        %s313 = scalar_lea.vmem [#allocation2], %s312
        %p314 = pneg %p75
        %p315 = pneg %p72
        %s316 = sand.u32 %s23, 1
        %s317 = scalar_lea.sflag [#allocation6], %s316
        %s318 = sand.u32 %s100, 1
        %s319 = smul.addr %s318, 16
        %s320 = scalar_lea.vmem [#allocation5], %s319
        %p321 = pneg %p113
        %p322 = pneg %p110
        %s323 = sand.u32 %s23, 1
        %s324 = scalar_lea.sflag [#allocation6], %s323
        %s325 = sand.u32 %s136, 1
        %s326 = smul.addr %s325, 16
        %s327 = scalar_lea.vmem [#allocation7], %s326
        %p328 = pneg %p149
        %p329 = pneg %p146
        %p330 = pneg %p179
        %p331 = pneg %p176
        %s332 = sand.u32 %s166, 1
        %s333 = scalar_lea.sflag [#allocation4], %s332
        %s334 = sand.u32 %s166, 1
        %s335 = smul.addr %s334, 16
        %s336 = scalar_lea.vmem [#allocation8], %s335
        %s337 = smul.u32 %s29, 2
        %s338 = sadd.s32 %s337, 4294967294
        %p339 = scmp.gt.s32.totalorder %s338, 0
        %s340 = scalar_select %p339, %s338, 0
        %s341 = sadd.s32 %s340, %s30
        %s342 = smul.u32 2, %s341
        %s343 = smul.u32 %s29, 2
        %s344 = sadd.s32 %s343, 4294967295
        %p345 = scmp.gt.s32.totalorder %s344, 0
        %s346 = scalar_select %p345, %s344, 0
        %s347 = sadd.s32 %s346, %s30
        %s348 = smul.u32 2, %s347
        %s349 = smul.u32 %s29, 2
        %p350 = scmp.gt.s32.totalorder %s349, 0
        %s351 = scalar_select %p350, %s349, 0
        %s352 = sadd.s32 %s351, %s30
        %s353 = smul.u32 2, %s352
        %s354 = sadd.s32 %s29, %s30
        %s355 = smul.u32 2, %s354
        %v356 = vld [vmem:[%s286] sm:$0xff]
        %v357 = vld [vmem:[%s286 + $0x8] sm:$0xff]
        %v358 = vld [vmem:[%s295] sm:$0xff]
        %v359 = vld [vmem:[%s295 + $0x8] sm:$0xff]
        %v360 = vadd.f32 %v356, %v358
        %v361 = vadd.f32 %v357, %v359
        %v362 = vld [vmem:[%s304] sm:$0xff]
        %v363 = vld [vmem:[%s304 + $0x8] sm:$0xff]
        %v364 = vadd.f32 %v360, %v362
        %v365 = vadd.f32 %v361, %v363
        %v366 = vmul.f32 %v364, 0.33333334
        %v367 = vmul.f32 %v365, 0.33333334
        %368 = vst [vmem:[%s336] sm:$0xff] %v366
        %369 = vst [vmem:[%s336 + $0x8] sm:$0xff] %v367
        %s370 = sand.u32 %s166, 1
        %s371 = scalar_lea.sflag [#allocation4], %s370
        %s372 = sand.u32 %s166, 1
        %s373 = smul.addr %s372, 16
        %s374 = scalar_lea.vmem [#allocation8], %s373
        // Predicated region
        $region45: #{tpu_custom_call.1} parent=31 // pred_check
          %p375 = pneg %p176
        $region46: #{tpu_custom_call.1} parent=31 // pred_check_branch
          %377 = sbr.rel (%p375) target = $region48
        $region47: #{tpu_custom_call.1} parent=31 // pred_region
          %s378 = sadd.s32 %s29, %s30
          %s379 = smul.u32 2, %s378
          %s381 = ssub.s32 256, 256
          %382 = vsyncadd %s371, %s381
          %s383 = smul.addr %s28, 8
          %s384 = sadd.s32 %s379, %s383
          %s385 = smul.addr %s384, 128
          %s386 = scalar_lea.hbm %s3, %s385
          %s388 = sshll.u32 %s374, 4
          %s389 = int_to_ptr.vmem [resolvable:$true] %s388
          %391 = dma.vmem_to_hbm [thread:$0]  %s389, 256, %s386, %s371
        $region48: #{tpu_custom_call.1} parent=31 // pred_fallthru
          _
      $region32: #{tpu_custom_call.1} parent=5 // pred_fallthru
        _
      %p392 = scmp.le.s32.totalorder 2, %s18
      // Predicated region
      $region49: #{tpu_custom_call.1} parent=5 // pred_check
        %p393 = pneg %p392
      $region50: #{tpu_custom_call.1} parent=5 // pred_check_branch
        %395 = sbr.rel (%p393) target = $region52
      $region51: #{tpu_custom_call.1} parent=5 // pred_region
        %s396 = ssub.s32 %s18, 2
        // Predicated region
        $region53: #{tpu_custom_call.1} parent=51 // pred_check
          %p397 = pneg %p182
        $region54: #{tpu_custom_call.1} parent=51 // pred_check_branch
          %399 = sbr.rel (%p397) target = $region56
        $region55: #{tpu_custom_call.1} parent=51 // pred_region
          %s400 = sand.u32 %s167, 1
          %s401 = scalar_lea.sflag [#allocation4], %s400
          %s402 = sand.u32 %s167, 1
          %s403 = smul.addr %s402, 16
          %s404 = scalar_lea.vmem [#allocation8], %s403
          %405 = dma.done %s401, 256
        $region56: #{tpu_custom_call.1} parent=51 // pred_fallthru
          _
      $region52: #{tpu_custom_call.1} parent=5 // pred_fallthru
        _
    $region6: #{tpu_custom_call.1} parent=1 // loop_footer
      %s22 = sadd.s32 1, %s18
    $region7: #{tpu_custom_call.1} parent=1 // loop_footer_branch
      %17 = sbr.rel target = $region3
    $region8: #{tpu_custom_call.1} parent=1 // loop_exit
      _
    %406 = vsyncpa [#allocation3], 1
    %s407 = scalar_lea.sflag [#allocation3], 1
    %408 = vsyncpa %s407, 1
    %409 = vsyncpa [#allocation6], 1
    %s410 = scalar_lea.sflag [#allocation6], 1
    %411 = vsyncpa %s410, 1
    %412 = vsyncpa [#allocation4], 1
    %s413 = scalar_lea.sflag [#allocation4], 1
    %414 = vsyncpa %s413, 1

</llo_original>
